<compile_context>
chip_gen: v5e
topology: v5e:2x2
jax: 0.10.0
libtpu: 0.0.40
codegen_flags: <defaults>
</compile_context>

<pallas_src>
import functools

import jax
import jax.numpy as jnp
from jax import lax
from jax.experimental import pallas as pl
from jax.experimental.pallas import tpu as pltpu


def _round_up(x, m):
    return ((x + m - 1) // m) * m


def _vmem_capacity_bytes():
    try:
        info = pltpu.get_tpu_info()
        cap = getattr(info, "vmem_capacity_bytes", None)
        if cap:
            return int(cap)
    except Exception:
        pass
    return 64 << 20  # conservative default (v7x-sized)


def _num_tensorcores():
    try:
        info = pltpu.get_tpu_info()
        for name in ("num_cores", "core_count", "num_tensorcores"):
            v = getattr(info, name, None)
            if v:
                return int(v)
    except Exception:
        pass
    try:
        return max(1, int(getattr(jax.devices()[0], "num_cores", 1)))
    except Exception:
        return 1


def _plan(B, C, N, x_bytes, out_bytes, vmem_cap):
    """Pick (tb, tn, vmem_limit) so both passes fit comfortably in VMEM."""

    def footprint(tb, tn):
        # pass 1: double-buffered x tile (+ bf16 hi/lo temporaries), f32 Gram
        # accumulator, double-buffered attention output block.
        p1 = (2 * tb * C * tn * x_bytes + 2 * tb * C * tn * 2
              + tb * C * C * 4 + 2 * tb * C * C * 2)
        # pass 2: bf16 attention in, x in, out -- all double-buffered.
        p2 = (2 * tb * C * C * 2 + 2 * tb * C * tn * x_bytes
              + 2 * tb * C * tn * max(out_bytes, 2))
        return max(p1, p2)

    budget = max((vmem_cap * 5) // 8 - (4 << 20), 8 << 20)  # Mosaic headroom
    if N <= 256:
        tn = _round_up(N, 128)
    else:
        tn = min(2048, _round_up(N, 256))
        while tn > 256 and footprint(1, tn) > budget:
            tn -= 256
    tb = 1
    for cand in range(min(B, 8), 0, -1):
        if B % cand == 0 and footprint(cand, tn) <= budget:
            tb = cand
            break
    vmem_limit = int(min((vmem_cap * 5) // 8,
                         max(32 << 20, footprint(tb, tn) + (8 << 20))))
    return tb, tn, vmem_limit


# ---------------------------------------------------------------------------
# Kernel helpers
# ---------------------------------------------------------------------------

def _spatial_mask(xt, n_start, n_total):
    """Zero out lanes past the real spatial extent (ragged last tile)."""
    col = n_start + lax.broadcasted_iota(jnp.int32, xt.shape, len(xt.shape) - 1)
    return jnp.where(col < n_total, xt, jnp.zeros_like(xt))


def _gram_update(acc_ref, xt):
    """acc += xt @ xt^T on the MXU in bf16 (hi/lo split for f32 inputs)."""
    if xt.dtype == jnp.bfloat16:
        acc_ref[...] += jnp.einsum("bcn,bdn->bcd", xt, xt,
                                   preferred_element_type=jnp.float32)
    else:
        # bf16 hi/lo split: keeps the 256x256 MXU on its fast bf16 path while
        # accumulating in f32.  The neglected lo*lo term leaves only a ~1e-3
        # absolute exponent error, benign for exp().
        xf = xt.astype(jnp.float32)
        hi = xf.astype(jnp.bfloat16)
        lo = (xf - hi.astype(jnp.float32)).astype(jnp.bfloat16)
        acc_ref[...] += (
            jnp.einsum("bcn,bdn->bcd", hi, hi, preferred_element_type=jnp.float32)
            + jnp.einsum("bcn,bdn->bcd", hi, lo, preferred_element_type=jnp.float32)
            + jnp.einsum("bcn,bdn->bcd", lo, hi, preferred_element_type=jnp.float32))


def _softmax_from_energy(energy):
    # softmax(rowmax(E) - E) == exp(rowmin(E) - E) / sum(...):
    # one row reduction instead of two max passes plus a subtract.
    row_min = jnp.min(energy, axis=-1, keepdims=True)
    p = jnp.exp(row_min - energy)
    denom = jnp.sum(p, axis=-1, keepdims=True)
    return p * pl.reciprocal(denom, approx=True)


# ---------------------------------------------------------------------------
# Kernels
# ---------------------------------------------------------------------------

def _energy_softmax_kernel(x_ref, attn_ref, acc_ref, *, n_total, tn, ragged):
    """Pass 1 (fused): accumulate E = x x^T over N tiles, finalize with softmax."""
    nt = pl.program_id(1)

    @pl.when(nt == 0)
    def _init():
        acc_ref[...] = jnp.zeros_like(acc_ref)

    xt = x_ref[...]                       # (tb, C, tn) native dtype
    if ragged:
        xt = _spatial_mask(xt, nt * tn, n_total)
    _gram_update(acc_ref, xt)

    @pl.when(nt == pl.num_programs(1) - 1)
    def _finalize():
        attn_ref[...] = _softmax_from_energy(acc_ref[...]).astype(attn_ref.dtype)


def _energy_partial_kernel(x_ref, e_ref, acc_ref, *, n_total, tn, grid_n_local,
                           ragged):
    """Pass 1 (split): per-split partial Gram accumulation (no softmax)."""
    s = pl.program_id(0)
    nt = pl.program_id(2)

    @pl.when(nt == 0)
    def _init():
        acc_ref[...] = jnp.zeros_like(acc_ref)

    xt = x_ref[...]
    if ragged:
        xt = _spatial_mask(xt, (s * grid_n_local + nt) * tn, n_total)
    _gram_update(acc_ref, xt)

    @pl.when(nt == grid_n_local - 1)
    def _finalize():
        e_ref[0] = acc_ref[...]


def _combine_softmax_kernel(e_ref, attn_ref):
    """Sum per-split partial energies and compute the attention softmax."""
    energy = jnp.sum(e_ref[...], axis=0)          # (1, C, C) f32
    attn_ref[...] = _softmax_from_energy(energy).astype(attn_ref.dtype)


def _apply_attention_kernel(gamma_ref, attn_ref, x_ref, o_ref):
    """Pass 2: out = gamma * (attention @ x) + x for one (tb, C, tn) tile."""
    gamma = gamma_ref[0]                          # SMEM scalar (f32)
    xt = x_ref[...]                               # (tb, C, tn) native dtype
    x_bf16 = xt if xt.dtype == jnp.bfloat16 else xt.astype(jnp.bfloat16)
    # bf16 operands -> full-rate MXU, f32 accumulation; attention is in [0, 1]
    # so the ~1e-3 relative rounding is benign for the residual output.
    out = jnp.einsum("bcd,bdn->bcn", attn_ref[...], x_bf16,
                     preferred_element_type=jnp.float32)
    o_ref[...] = (gamma * out + xt.astype(jnp.float32)).astype(o_ref.dtype)


# ---------------------------------------------------------------------------
# Wrapper
# ---------------------------------------------------------------------------

def cam_module(x, gamma, *, tn=None, n_split=None):
    """x: (B, C, H, W), gamma: scalar parameter. Returns (B, C, H, W)."""
    B, C, H, W = x.shape
    N = H * W
    out_dtype = x.dtype
    x_bytes = jnp.dtype(x.dtype).itemsize
    out_bytes = jnp.dtype(out_dtype).itemsize

    vmem_cap = _vmem_capacity_bytes()
    tb, tn_auto, vmem_limit = _plan(B, C, N, x_bytes, out_bytes, vmem_cap)
    tn = tn_auto if tn is None else _round_up(int(tn), 128)

    grid_b = B // tb
    grid_n = pl.cdiv(N, tn)
    ragged = (N % tn) != 0

    # Optional split of pass 1's N reduction (v7x has 2 TensorCores; at B == 1
    # the batch axis alone leaves one idle).
    if n_split is None:
        n_split = 2 if (grid_b == 1 and grid_n >= 2 and grid_n % 2 == 0
                        and _num_tensorcores() >= 2) else 1
    n_split = max(1, int(n_split))
    if grid_n % n_split != 0:
        n_split = 1
    grid_n_local = grid_n // n_split

    x_flat = x.reshape(B, C, N)                   # layout-preserving, no copy/cast
    gamma_arr = jnp.reshape(gamma, (1,)).astype(jnp.float32)

    gram_flops = 2 * B * C * C * N * (1 if x.dtype == jnp.bfloat16 else 3)

    if n_split == 1:
        # Pass 1 (fused): per-batch attention matrices (B, C, C), bf16.
        attention = pl.pallas_call(
            functools.partial(_energy_softmax_kernel, n_total=N, tn=tn,
                              ragged=ragged),
            out_shape=jax.ShapeDtypeStruct((B, C, C), jnp.bfloat16),
            grid_spec=pltpu.PrefetchScalarGridSpec(
                num_scalar_prefetch=0,
                grid=(grid_b, grid_n),
                in_specs=[pl.BlockSpec((tb, C, tn), lambda b, nt: (b, 0, nt))],
                out_specs=pl.BlockSpec((tb, C, C), lambda b, nt: (b, 0, 0)),
                scratch_shapes=[pltpu.VMEM((tb, C, C), jnp.float32)],
            ),
            compiler_params=pltpu.CompilerParams(
                dimension_semantics=("parallel", "arbitrary"),
                vmem_limit_bytes=vmem_limit,
            ),
            cost_estimate=pl.CostEstimate(
                flops=gram_flops,
                transcendentals=B * C * C,
                bytes_accessed=B * C * N * x_bytes + B * C * C * 2),
        )(x_flat)
    else:
        # Pass 1a: per-split partial energies (n_split, B, C, C), f32.
        partial_e = pl.pallas_call(
            functools.partial(_energy_partial_kernel, n_total=N, tn=tn,
                              grid_n_local=grid_n_local, ragged=ragged),
            out_shape=jax.ShapeDtypeStruct((n_split, B, C, C), jnp.float32),
            grid_spec=pltpu.PrefetchScalarGridSpec(
                num_scalar_prefetch=0,
                grid=(n_split, grid_b, grid_n_local),
                in_specs=[pl.BlockSpec(
                    (tb, C, tn),
                    lambda s, b, nt: (b, 0, s * grid_n_local + nt))],
                out_specs=pl.BlockSpec(
                    (1, tb, C, C), lambda s, b, nt: (s, b, 0, 0)),
                scratch_shapes=[pltpu.VMEM((tb, C, C), jnp.float32)],
            ),
            compiler_params=pltpu.CompilerParams(
                dimension_semantics=("parallel", "parallel", "arbitrary"),
                vmem_limit_bytes=vmem_limit,
            ),
            cost_estimate=pl.CostEstimate(
                flops=gram_flops,
                transcendentals=0,
                bytes_accessed=B * C * N * x_bytes + n_split * B * C * C * 4),
        )(x_flat)

        # Pass 1b: combine partial energies + softmax -> (B, C, C) bf16.
        attention = pl.pallas_call(
            _combine_softmax_kernel,
            out_shape=jax.ShapeDtypeStruct((B, C, C), jnp.bfloat16),
            grid_spec=pltpu.PrefetchScalarGridSpec(
                num_scalar_prefetch=0,
                grid=(B,),
                in_specs=[pl.BlockSpec((n_split, 1, C, C),
                                       lambda b: (0, b, 0, 0))],
                out_specs=pl.BlockSpec((1, C, C), lambda b: (b, 0, 0)),
            ),
            compiler_params=pltpu.CompilerParams(
                dimension_semantics=("parallel",),
                vmem_limit_bytes=vmem_limit,
            ),
            cost_estimate=pl.CostEstimate(
                flops=n_split * B * C * C,
                transcendentals=B * C * C,
                bytes_accessed=n_split * B * C * C * 4 + B * C * C * 2),
        )(partial_e)

    # Pass 2: out = gamma * (attention @ x) + x, streamed over lane-dense N
    # tiles; both grid axes parallel.  Output shape is exactly (B, C, N): the
    # ragged last tile is handled by Pallas' boundary masking (no post-slice).
    out_flat = pl.pallas_call(
        _apply_attention_kernel,
        out_shape=jax.ShapeDtypeStruct((B, C, N), out_dtype),
        grid_spec=pltpu.PrefetchScalarGridSpec(
            num_scalar_prefetch=0,
            grid=(grid_b, grid_n),
            in_specs=[
                pl.BlockSpec(memory_space=pltpu.MemorySpace.SMEM),       # gamma
                pl.BlockSpec((tb, C, C), lambda b, nt: (b, 0, 0)),       # attention
                pl.BlockSpec((tb, C, tn), lambda b, nt: (b, 0, nt)),     # x tile
            ],
            out_specs=pl.BlockSpec((tb, C, tn), lambda b, nt: (b, 0, nt)),
        ),
        compiler_params=pltpu.CompilerParams(
            dimension_semantics=("parallel", "parallel"),
            vmem_limit_bytes=vmem_limit,
        ),
        cost_estimate=pl.CostEstimate(
            flops=2 * B * C * C * N,
            transcendentals=0,
            bytes_accessed=B * C * N * (x_bytes + out_bytes) + B * C * C * 2),
    )(gamma_arr, attention, x_flat)

    return out_flat.reshape(B, C, H, W)


def cam_module_ref(x, gamma):
    """Pure-JAX reference matching the PyTorch forward exactly (f32 matmuls)."""
    B, C, H, W = x.shape
    q = x.reshape(B, C, -1).astype(jnp.float32)
    energy = jnp.einsum("bcn,bdn->bcd", q, q, precision=lax.Precision.HIGHEST)
    energy_new = jnp.max(energy, axis=-1, keepdims=True) - energy
    attention = jax.nn.softmax(energy_new, axis=-1)
    out = jnp.einsum("bcd,bdn->bcn", attention, q, precision=lax.Precision.HIGHEST)
    out = out.reshape(B, C, H, W)
    return gamma * out + x.astype(jnp.float32)


if __name__ == "__main__":
    key = jax.random.PRNGKey(0)
    key_a, key_b = jax.random.split(key)

    # Parameter from __init__: gamma initialized to zero in the module; use a
    # deterministic nonzero value so the attention path contributes.
    gamma = jnp.array(0.5, dtype=jnp.float32)

    # Case A: required small shape, f32 input -> exercises the hi/lo-split Gram
    # path and the fused-softmax pass 1.
    xA = jax.random.normal(key_a, (2, 4, 16, 16), dtype=jnp.float32)
    outA = jax.block_until_ready(cam_module(xA, gamma))
    refA = cam_module_ref(xA, gamma)
    assert outA.shape == xA.shape
    errA = jnp.max(jnp.abs(outA - refA))
    # bf16 attention weights / bf16 value matmul / approx reciprocal give ~1e-3
    # level differences vs the f32 reference -> loosened tolerance.
    assert jnp.allclose(outA, refA, atol=3e-2, rtol=3e-2), f"case A max err {errA}"

    # Case B: bf16 streaming, ragged spatial tail (N = 144 vs tn = 128) and the
    # split N-reduction + combine kernel (the B == 1 / v7x path).
    xB = jax.random.normal(key_b, (1, 16, 12, 12),
                           dtype=jnp.float32).astype(jnp.bfloat16)
    outB = jax.block_until_ready(cam_module(xB, gamma, tn=128, n_split=2))
    refB = cam_module_ref(xB, gamma)
    assert outB.shape == xB.shape
    errB = jnp.max(jnp.abs(outB.astype(jnp.float32) - refB))
    assert jnp.allclose(outB.astype(jnp.float32), refB, atol=6e-2, rtol=6e-2), \
        f"case B max err {errB}"

    print("KERNEL_OK")
</pallas_src>

<mosaic_0001>
module attributes {stable_mosaic.version = 11 : i64} {
  func.func @_energy_softmax_kernel(%arg0: i32, %arg1: i32, %arg2: memref<2x4x256xf32, #tpu.memory_space<vmem>>, %arg3: memref<2x4x4xbf16, #tpu.memory_space<vmem>>, %arg4: memref<2x4x4xf32, #tpu.memory_space<vmem>>) attributes {dimension_semantics = [#tpu.dimension_semantics<parallel>, #tpu.dimension_semantics<arbitrary>], iteration_bounds = array<i64: 1, 1>, scalar_prefetch = 0 : i64, scratch_operands = 1 : i64, tpu.core_type = #tpu.core_type<tc>, window_params = [{transform_indices = @transform_0, window_bounds = array<i64: 2, 4, 256>}, {transform_indices = @transform_1, window_bounds = array<i64: 2, 4, 4>}]} {
    %c0_i32 = arith.constant 0 : i32
    %0 = arith.cmpi eq, %arg1, %c0_i32 : i32
    %1 = arith.extui %0 : i1 to i32
    %c0_i32_0 = arith.constant 0 : i32
    %2 = arith.cmpi ne, %1, %c0_i32_0 : i32
    scf.if %2 {
      %cst_13 = arith.constant 0.000000e+00 : f32
      %19 = vector.broadcast %cst_13 : f32 to vector<2x4x4xf32>
      %c0_14 = arith.constant 0 : index
      %c0_15 = arith.constant 0 : index
      %c0_16 = arith.constant 0 : index
      %20 = vector.load %arg4[%c0_14, %c0_15, %c0_16] : memref<2x4x4xf32, #tpu.memory_space<vmem>>, vector<2x4x4xf32>
      tpu.vector_store %arg4[%c0_14, %c0_15, %c0_16], %19 {strides = array<i32>} : memref<2x4x4xf32, #tpu.memory_space<vmem>>, vector<2x4x4xf32>,
    } else {
    }
    %c0 = arith.constant 0 : index
    %c0_1 = arith.constant 0 : index
    %c0_2 = arith.constant 0 : index
    %3 = vector.load %arg2[%c0, %c0_1, %c0_2] : memref<2x4x256xf32, #tpu.memory_space<vmem>>, vector<2x4x256xf32>
    %4 = arith.truncf %3 : vector<2x4x256xf32> to vector<2x4x256xbf16>
    %5 = arith.extf %4 : vector<2x4x256xbf16> to vector<2x4x256xf32>
    %6 = arith.subf %3, %5 : vector<2x4x256xf32>
    %7 = arith.truncf %6 : vector<2x4x256xf32> to vector<2x4x256xbf16>
    %c0_3 = arith.constant 0 : index
    %c0_4 = arith.constant 0 : index
    %c0_5 = arith.constant 0 : index
    %8 = vector.load %arg4[%c0_3, %c0_4, %c0_5] : memref<2x4x4xf32, #tpu.memory_space<vmem>>, vector<2x4x4xf32>
    "tpu.trace_start"() <{level = 10 : i32, message = "bcn,bdn->bcd"}> : () -> ()
    %cst = arith.constant dense<0.000000e+00> : vector<2x4x4xf32>
    %9 = tpu.matmul %4, %4, %cst {dimension_numbers = #tpu.dot_dimension_numbers<[2], [2], [1], [1], [0, 0, 0, 1, 1, 1], [0], [0]>} : vector<2x4x256xbf16>, vector<2x4x256xbf16>, vector<2x4x4xf32> -> vector<2x4x4xf32>
    %cst_6 = arith.constant dense<0.000000e+00> : vector<2x4x4xf32>
    %10 = tpu.matmul %4, %7, %cst_6 {dimension_numbers = #tpu.dot_dimension_numbers<[2], [2], [1], [1], [0, 0, 0, 1, 1, 1], [0], [0]>} : vector<2x4x256xbf16>, vector<2x4x256xbf16>, vector<2x4x4xf32> -> vector<2x4x4xf32>
    "tpu.trace_stop"() : () -> ()
    %11 = arith.addf %9, %10 : vector<2x4x4xf32>
    "tpu.trace_start"() <{level = 10 : i32, message = "bcn,bdn->bcd"}> : () -> ()
    %cst_7 = arith.constant dense<0.000000e+00> : vector<2x4x4xf32>
    %12 = tpu.matmul %7, %4, %cst_7 {dimension_numbers = #tpu.dot_dimension_numbers<[2], [2], [1], [1], [0, 0, 0, 1, 1, 1], [0], [0]>} : vector<2x4x256xbf16>, vector<2x4x256xbf16>, vector<2x4x4xf32> -> vector<2x4x4xf32>
    "tpu.trace_stop"() : () -> ()
    %13 = arith.addf %11, %12 : vector<2x4x4xf32>
    %14 = arith.addf %8, %13 : vector<2x4x4xf32>
    %c0_8 = arith.constant 0 : index
    %c0_9 = arith.constant 0 : index
    %c0_10 = arith.constant 0 : index
    %15 = vector.load %arg4[%c0_8, %c0_9, %c0_10] : memref<2x4x4xf32, #tpu.memory_space<vmem>>, vector<2x4x4xf32>
    tpu.vector_store %arg4[%c0_8, %c0_9, %c0_10], %14 {strides = array<i32>} : memref<2x4x4xf32, #tpu.memory_space<vmem>>, vector<2x4x4xf32>,
    %c0_i32_11 = arith.constant 0 : i32
    %16 = arith.cmpi eq, %arg1, %c0_i32_11 : i32
    %17 = arith.extui %16 : i1 to i32
    %c0_i32_12 = arith.constant 0 : i32
    %18 = arith.cmpi ne, %17, %c0_i32_12 : i32
    scf.if %18 {
      %c0_13 = arith.constant 0 : index
      %c0_14 = arith.constant 0 : index
      %c0_15 = arith.constant 0 : index
      %19 = vector.load %arg4[%c0_13, %c0_14, %c0_15] : memref<2x4x4xf32, #tpu.memory_space<vmem>>, vector<2x4x4xf32>
      %cst_16 = arith.constant dense<0x7F800000> : vector<2x4xf32>
      %20 = vector.multi_reduction <minimumf>, %19, %cst_16 [2] : vector<2x4x4xf32> to vector<2x4xf32>
      %21 = vector.shape_cast %20 : vector<2x4xf32> to vector<2x4x1xf32>
      %22 = vector.broadcast %21 : vector<2x4x1xf32> to vector<2x4x4xf32>
      %23 = arith.subf %22, %19 : vector<2x4x4xf32>
      %24 = math.exp %23 : vector<2x4x4xf32>
      %cst_17 = arith.constant dense<0.000000e+00> : vector<2x4xf32>
      %25 = vector.multi_reduction <add>, %24, %cst_17 [2] : vector<2x4x4xf32> to vector<2x4xf32>
      %26 = vector.shape_cast %25 : vector<2x4xf32> to vector<2x4x1xf32>
      %27 = tpu.reciprocal %26 {approx = true} : vector<2x4x1xf32> -> vector<2x4x1xf32>
      %28 = vector.broadcast %27 : vector<2x4x1xf32> to vector<2x4x4xf32>
      %29 = arith.mulf %24, %28 : vector<2x4x4xf32>
      %30 = arith.truncf %29 : vector<2x4x4xf32> to vector<2x4x4xbf16>
      %c0_18 = arith.constant 0 : index
      %c0_19 = arith.constant 0 : index
      %c0_20 = arith.constant 0 : index
      %31 = vector.load %arg3[%c0_18, %c0_19, %c0_20] : memref<2x4x4xbf16, #tpu.memory_space<vmem>>, vector<2x4x4xbf16>
      tpu.vector_store %arg3[%c0_18, %c0_19, %c0_20], %30 {strides = array<i32>} : memref<2x4x4xbf16, #tpu.memory_space<vmem>>, vector<2x4x4xbf16>,
    } else {
    }
    return
  }
  func.func @transform_0(%arg0: i32, %arg1: i32) -> (i32, i32, i32) {
    %c0_i32 = arith.constant 0 : i32
    %c0_i32_0 = arith.constant 0 : i32
    return %arg0, %c0_i32, %arg1 : i32, i32, i32
  }
  func.func @transform_1(%arg0: i32, %arg1: i32) -> (i32, i32, i32) {
    %c0_i32 = arith.constant 0 : i32
    %c0_i32_0 = arith.constant 0 : i32
    %c0_i32_1 = arith.constant 0 : i32
    return %arg0, %c0_i32, %c0_i32_0 : i32, i32, i32
  }
}

</mosaic_0001>

<llo_original>
// kernel: tpu_custom_call.1
$region0: #{tpu_custom_call.1}
  #allocation0 [shape = 'u32[]', space=smem, size = 0x4, offset = 0x4, fixed_abs, tag = 'smem constant byte address 0x4 - core index']
  #allocation1 [shape = 'u32[72,128]{1,0:T(1,128)}', space=vmem, size = 0x9000, scoped, tag = 'internal scratch']
  #allocation2 [shape = 'f32[2,4,4]{2,1,0:T(4,128)}', space=vmem, size = 0x1000, scoped, tag = 'scratch operand']
  %s0 = inlined_call_operand.hbm [shape: f32[2,4,256], index: 0, kind: input, shape index: {}]
  %s1 = inlined_call_operand.hbm [shape: bf16[2,4,4], index: 1, kind: output, shape index: {}]
  %s2 = sld [smem:[#allocation0]]
  $region26: #{tpu_custom_call.1} parent=0
    _
  %s4 = ssub.s32 1, %s2
  %s5 = scalar_select 0, %s4, %s2
  $region1: #{tpu_custom_call.1} parent=0
    #allocation3 [shape = 'u8[8192]{0}', space=vmem, size = 0x2000, scoped, tag = 'input window, operand 0, single buffered']
    #allocation4 [shape = 's32[1]{0}', space=sflag, size = 0x4, scoped, tag = 'scoped memory for tpu_custom_call.1']
    #allocation5 [shape = 's32[1]{0}', space=sflag, size = 0x4, scoped, tag = 'scoped memory for tpu_custom_call.1']
    #allocation6 [shape = 'u8[2048]{0}', space=vmem, size = 0x800, scoped, tag = 'output window, operand 0, single buffered']
    %6 = vsyncpa [#allocation4], 0
    %7 = vsyncpa [#allocation5], 0
    // Predicated region
    $region2: #{tpu_custom_call.1} parent=1 // pred_check
      _
    $region3: #{tpu_custom_call.1} parent=1 // pred_check_branch
      %9 = sbr.rel (0) target = $region5
    $region4: #{tpu_custom_call.1} parent=1 // pred_region
      %11 = vsyncadd [#allocation4], 0
      %s12 = sshll.u32 %s0, 4
      %s13 = int_to_ptr.hbm [resolvable:$true] %s12
      %s14 = sshll.u32 [#allocation3], 4
      %s15 = int_to_ptr.vmem [resolvable:$true] %s14
      %20 = dma.hbm_to_vmem [thread:$0]  %s13, 256, %s15, [#allocation4], 128, 128, 8
    $region5: #{tpu_custom_call.1} parent=1 // pred_fallthru
      _
    // Predicated region
    $region6: #{tpu_custom_call.1} parent=1 // pred_check
      _
    $region7: #{tpu_custom_call.1} parent=1 // pred_check_branch
      %22 = sbr.rel (0) target = $region9
    $region8: #{tpu_custom_call.1} parent=1 // pred_region
      %24 = dma.done [#allocation4], 256
    $region9: #{tpu_custom_call.1} parent=1 // pred_fallthru
      _
    %p26 = scmp.eq.s32.totalorder 0, 0
    // Predicated region
    $region10: #{tpu_custom_call.1} parent=1 // pred_check
      %p27 = pneg %p26
    $region11: #{tpu_custom_call.1} parent=1 // pred_check_branch
      %29 = sbr.rel (%p27) target = $region13
    $region12: #{tpu_custom_call.1} parent=1 // pred_region
      %vm30 = vcmask 27648
      %31 = vst.msk [vmem:[#allocation2] sm:$0xf] %vm30, 0.0
      %32 = vst.msk [vmem:[#allocation2 + $0x4] sm:$0xf] %vm30, 0.0
    $region13: #{tpu_custom_call.1} parent=1 // pred_fallthru
      _
    %v33 = vld [vmem:[#allocation3] sm:$0xff]
    %v34 = vld [vmem:[#allocation3 + $0x8] sm:$0xff]
    %37 = vst [vmem:[#allocation1] ss:$2 sm:$0xff] %v33
    %v38 = vld.sshfl [vmem:[#allocation1] sm:$0xff pattern:$0x75316420]
    %v39 = vld.sshfl [vmem:[#allocation1 + $0x8] sm:$0xff pattern:$0x75316420]
    %s40 = scalar_lea.vmem [#allocation1], 16
    %41 = vst [vmem:[%s40] ss:$2 sm:$0xff] %v34
    %v42 = vld.sshfl [vmem:[#allocation1 + $0x10] sm:$0xff pattern:$0x75316420]
    %v43 = vld.sshfl [vmem:[#allocation1 + $0x18] sm:$0xff pattern:$0x75316420]
    %v48 = vpack.c.bf16 %v39, %v38
    %v49 = vpack.c.bf16 %v43, %v42
    %v50 = vunpack.c.l.bf16 %v48
    %v51 = vunpack.c.h.bf16 %v48
    %v52 = vunpack.c.l.bf16 %v49
    %v53 = vunpack.c.h.bf16 %v49
    %v58 = vrot.slane %v51, 4
    %v59 = vrot.slane %v53, 4
    %vm60 = vcmask 1043456
    %v61 = vsel %vm60, %v50, %v58
    %v62 = vsel %vm60, %v52, %v59
    %v65 = vsub.f32 %v33, %v61
    %v66 = vsub.f32 %v34, %v62
    %69 = vst [vmem:[#allocation1] ss:$2 sm:$0xff] %v65
    %v70 = vld.sshfl [vmem:[#allocation1] sm:$0xff pattern:$0x75316420]
    %v71 = vld.sshfl [vmem:[#allocation1 + $0x8] sm:$0xff pattern:$0x75316420]
    %s72 = scalar_lea.vmem [#allocation1], 16
    %73 = vst [vmem:[%s72] ss:$2 sm:$0xff] %v66
    %v74 = vld.sshfl [vmem:[#allocation1 + $0x10] sm:$0xff pattern:$0x75316420]
    %v75 = vld.sshfl [vmem:[#allocation1 + $0x18] sm:$0xff pattern:$0x75316420]
    %v80 = vpack.c.bf16 %v71, %v70
    %v81 = vpack.c.bf16 %v75, %v74
    %v82 = vld [vmem:[#allocation2] sm:$0xf]
    %v83 = vld [vmem:[#allocation2 + $0x4] sm:$0xf]
    %v85 = vunpack.c.l.b16 %v48
    %v86 = vunpack.c.h.b16 %v48
    %v87 = vpack.c.b16 %v85, %v85
    %v88 = vpack.c.b16 %v86, %v86
    %v92 = vunpack.c.l.b16 %v80
    %v93 = vunpack.c.h.b16 %v80
    %v94 = vpack.c.b16 %v92, %v92
    %v95 = vpack.c.b16 %v93, %v93
    %98 = vmatpush.bf16.xpose.msra.mxu0 0
    %99 = vmatpush.bf16.xpose.msra.mxu0 0
    %100 = vmatpush.bf16.xpose.msra.mxu0 0
    %101 = vmatpush.bf16.xpose.msra.mxu0 0
    %102 = vmatpush.bf16.xpose.msra.mxu0 0
    %103 = vmatpush.bf16.xpose.msra.mxu0 0
    %104 = vmatpush.bf16.xpose.msra.mxu0 0
    %105 = vmatpush.bf16.xpose.msra.mxu0 %v94
    %106 = vmatmul.bf16.gmra.mxu0 %v87
    %v107 = vpop.f32.mrf.mxu0
    %v108 = vadd.f32 0.0, %v107
    %v109 = vpop.f32.mrf.mxu0
    %110 = vdwg.mxu0
    %111 = vmatpush.bf16.xpose.msra.mxu0 0
    %112 = vmatpush.bf16.xpose.msra.mxu0 0
    %113 = vmatpush.bf16.xpose.msra.mxu0 0
    %114 = vmatpush.bf16.xpose.msra.mxu0 0
    %115 = vmatpush.bf16.xpose.msra.mxu0 0
    %116 = vmatpush.bf16.xpose.msra.mxu0 0
    %117 = vmatpush.bf16.xpose.msra.mxu0 0
    %118 = vmatpush.bf16.xpose.msra.mxu0 %v95
    %119 = vmatmul.bf16.gmra.mxu0 %v88
    %v120 = vpop.f32.mrf.mxu0
    %v121 = vadd.f32 %v108, %v120
    %v122 = vpop.f32.mrf.mxu0
    %123 = vdwg.mxu0
    %v125 = vunpack.c.l.b16 %v49
    %v126 = vunpack.c.h.b16 %v49
    %v127 = vpack.c.b16 %v125, %v125
    %v128 = vpack.c.b16 %v126, %v126
    %v132 = vunpack.c.l.b16 %v81
    %v133 = vunpack.c.h.b16 %v81
    %v134 = vpack.c.b16 %v132, %v132
    %v135 = vpack.c.b16 %v133, %v133
    %138 = vmatpush.bf16.xpose.msra.mxu0 0
    %139 = vmatpush.bf16.xpose.msra.mxu0 0
    %140 = vmatpush.bf16.xpose.msra.mxu0 0
    %141 = vmatpush.bf16.xpose.msra.mxu0 0
    %142 = vmatpush.bf16.xpose.msra.mxu0 0
    %143 = vmatpush.bf16.xpose.msra.mxu0 0
    %144 = vmatpush.bf16.xpose.msra.mxu0 0
    %145 = vmatpush.bf16.xpose.msra.mxu0 %v134
    %146 = vmatmul.bf16.gmra.mxu0 %v127
    %v147 = vpop.f32.mrf.mxu0
    %v148 = vadd.f32 0.0, %v147
    %v149 = vpop.f32.mrf.mxu0
    %150 = vdwg.mxu0
    %151 = vmatpush.bf16.xpose.msra.mxu0 0
    %152 = vmatpush.bf16.xpose.msra.mxu0 0
    %153 = vmatpush.bf16.xpose.msra.mxu0 0
    %154 = vmatpush.bf16.xpose.msra.mxu0 0
    %155 = vmatpush.bf16.xpose.msra.mxu0 0
    %156 = vmatpush.bf16.xpose.msra.mxu0 0
    %157 = vmatpush.bf16.xpose.msra.mxu0 0
    %158 = vmatpush.bf16.xpose.msra.mxu0 %v135
    %159 = vmatmul.bf16.gmra.mxu0 %v128
    %v160 = vpop.f32.mrf.mxu0
    %v161 = vadd.f32 %v148, %v160
    %v162 = vpop.f32.mrf.mxu0
    %163 = vdwg.mxu0
    %164 = vmatpush.bf16.xpose.msra.mxu0 0
    %165 = vmatpush.bf16.xpose.msra.mxu0 0
    %166 = vmatpush.bf16.xpose.msra.mxu0 0
    %167 = vmatpush.bf16.xpose.msra.mxu0 0
    %168 = vmatpush.bf16.xpose.msra.mxu0 0
    %169 = vmatpush.bf16.xpose.msra.mxu0 0
    %170 = vmatpush.bf16.xpose.msra.mxu0 0
    %171 = vmatpush.bf16.xpose.msra.mxu0 %v87
    %172 = vmatmul.bf16.gmra.mxu0 %v87
    %v173 = vpop.f32.mrf.mxu0
    %v174 = vadd.f32 %v121, %v173
    %v175 = vpop.f32.mrf.mxu0
    %176 = vdwg.mxu0
    %177 = vmatpush.bf16.xpose.msra.mxu0 0
    %178 = vmatpush.bf16.xpose.msra.mxu0 0
    %179 = vmatpush.bf16.xpose.msra.mxu0 0
    %180 = vmatpush.bf16.xpose.msra.mxu0 0
    %181 = vmatpush.bf16.xpose.msra.mxu0 0
    %182 = vmatpush.bf16.xpose.msra.mxu0 0
    %183 = vmatpush.bf16.xpose.msra.mxu0 0
    %184 = vmatpush.bf16.xpose.msra.mxu0 %v88
    %185 = vmatmul.bf16.gmra.mxu0 %v88
    %v186 = vpop.f32.mrf.mxu0
    %v187 = vadd.f32 %v174, %v186
    %v188 = vpop.f32.mrf.mxu0
    %189 = vdwg.mxu0
    %190 = vmatpush.bf16.xpose.msra.mxu0 0
    %191 = vmatpush.bf16.xpose.msra.mxu0 0
    %192 = vmatpush.bf16.xpose.msra.mxu0 0
    %193 = vmatpush.bf16.xpose.msra.mxu0 0
    %194 = vmatpush.bf16.xpose.msra.mxu0 0
    %195 = vmatpush.bf16.xpose.msra.mxu0 0
    %196 = vmatpush.bf16.xpose.msra.mxu0 0
    %197 = vmatpush.bf16.xpose.msra.mxu0 %v127
    %198 = vmatmul.bf16.gmra.mxu0 %v127
    %v199 = vpop.f32.mrf.mxu0
    %v200 = vadd.f32 %v161, %v199
    %v201 = vpop.f32.mrf.mxu0
    %202 = vdwg.mxu0
    %203 = vmatpush.bf16.xpose.msra.mxu0 0
    %204 = vmatpush.bf16.xpose.msra.mxu0 0
    %205 = vmatpush.bf16.xpose.msra.mxu0 0
    %206 = vmatpush.bf16.xpose.msra.mxu0 0
    %207 = vmatpush.bf16.xpose.msra.mxu0 0
    %208 = vmatpush.bf16.xpose.msra.mxu0 0
    %209 = vmatpush.bf16.xpose.msra.mxu0 0
    %210 = vmatpush.bf16.xpose.msra.mxu0 %v128
    %211 = vmatmul.bf16.gmra.mxu0 %v128
    %v212 = vpop.f32.mrf.mxu0
    %v213 = vadd.f32 %v200, %v212
    %v214 = vpop.f32.mrf.mxu0
    %215 = vdwg.mxu0
    %216 = vmatpush.bf16.xpose.msra.mxu0 0
    %217 = vmatpush.bf16.xpose.msra.mxu0 0
    %218 = vmatpush.bf16.xpose.msra.mxu0 0
    %219 = vmatpush.bf16.xpose.msra.mxu0 0
    %220 = vmatpush.bf16.xpose.msra.mxu0 0
    %221 = vmatpush.bf16.xpose.msra.mxu0 0
    %222 = vmatpush.bf16.xpose.msra.mxu0 0
    %223 = vmatpush.bf16.xpose.msra.mxu0 %v87
    %224 = vmatmul.bf16.gmra.mxu0 %v94
    %v225 = vpop.f32.mrf.mxu0
    %v226 = vadd.f32 0.0, %v225
    %v227 = vpop.f32.mrf.mxu0
    %228 = vdwg.mxu0
    %229 = vmatpush.bf16.xpose.msra.mxu0 0
    %230 = vmatpush.bf16.xpose.msra.mxu0 0
    %231 = vmatpush.bf16.xpose.msra.mxu0 0
    %232 = vmatpush.bf16.xpose.msra.mxu0 0
    %233 = vmatpush.bf16.xpose.msra.mxu0 0
    %234 = vmatpush.bf16.xpose.msra.mxu0 0
    %235 = vmatpush.bf16.xpose.msra.mxu0 0
    %236 = vmatpush.bf16.xpose.msra.mxu0 %v88
    %237 = vmatmul.bf16.gmra.mxu0 %v95
    %v238 = vpop.f32.mrf.mxu0
    %v239 = vadd.f32 %v226, %v238
    %v240 = vpop.f32.mrf.mxu0
    %241 = vdwg.mxu0
    %242 = vmatpush.bf16.xpose.msra.mxu0 0
    %243 = vmatpush.bf16.xpose.msra.mxu0 0
    %244 = vmatpush.bf16.xpose.msra.mxu0 0
    %245 = vmatpush.bf16.xpose.msra.mxu0 0
    %246 = vmatpush.bf16.xpose.msra.mxu0 0
    %247 = vmatpush.bf16.xpose.msra.mxu0 0
    %248 = vmatpush.bf16.xpose.msra.mxu0 0
    %249 = vmatpush.bf16.xpose.msra.mxu0 %v127
    %250 = vmatmul.bf16.gmra.mxu0 %v134
    %v251 = vpop.f32.mrf.mxu0
    %v252 = vadd.f32 0.0, %v251
    %v253 = vpop.f32.mrf.mxu0
    %254 = vdwg.mxu0
    %255 = vmatpush.bf16.xpose.msra.mxu0 0
    %256 = vmatpush.bf16.xpose.msra.mxu0 0
    %257 = vmatpush.bf16.xpose.msra.mxu0 0
    %258 = vmatpush.bf16.xpose.msra.mxu0 0
    %259 = vmatpush.bf16.xpose.msra.mxu0 0
    %260 = vmatpush.bf16.xpose.msra.mxu0 0
    %261 = vmatpush.bf16.xpose.msra.mxu0 0
    %262 = vmatpush.bf16.xpose.msra.mxu0 %v128
    %263 = vmatmul.bf16.gmra.mxu0 %v135
    %v264 = vpop.f32.mrf.mxu0
    %v265 = vadd.f32 %v252, %v264
    %v266 = vpop.f32.mrf.mxu0
    %267 = vdwg.mxu0
    %v268 = vadd.f32 %v187, %v239
    %v269 = vadd.f32 %v213, %v265
    %v270 = vadd.f32 %v82, %v268
    %v271 = vadd.f32 %v83, %v269
    %vm272 = vcmask 27648
    %273 = vst.msk [vmem:[#allocation2] sm:$0xf] %vm272, %v270
    %274 = vst.msk [vmem:[#allocation2 + $0x4] sm:$0xf] %vm272, %v271
    // Predicated region
    $region14: #{tpu_custom_call.1} parent=1 // pred_check
      %p275 = pneg %p26
    $region15: #{tpu_custom_call.1} parent=1 // pred_check_branch
      %277 = sbr.rel (%p275) target = $region17
    $region16: #{tpu_custom_call.1} parent=1 // pred_region
      %v278 = vld [vmem:[#allocation2] sm:$0xf]
      %v279 = vld [vmem:[#allocation2 + $0x4] sm:$0xf]
      %v280 = vsel %vm272, %v278, inf
      %281 = vmin.xlane.f32.xlu0 %v280
      %v282 = vpop.xlane.xlu0 %281
      %v283 = vsel %vm272, %v279, inf
      %284 = vmin.xlane.f32.xlu0 %v283
      %v285 = vpop.xlane.xlu0 %284
      %v286 = vsub.f32 %v282, %v278
      %v287 = vsub.f32 %v285, %v279
      %v288 = vmul.f32 %v286, 1.442695
      %v289 = vpow.pop %v288
      %v290 = vmul.f32 %v287, 1.442695
      %v291 = vpow.pop %v290
      %v292 = vsel %vm272, %v289, 0.0
      %293 = vadd.xlane.f32.xlu0 %v292
      %v294 = vpop.xlane.xlu0 %293
      %v295 = vsel %vm272, %v291, 0.0
      %296 = vadd.xlane.f32.xlu0 %v295
      %v297 = vpop.xlane.xlu0 %296
      %v298 = vrcp.pop %v294
      %v299 = vrcp.pop %v297
      %v300 = vmul.f32 %v289, %v298
      %v301 = vmul.f32 %v291, %v299
      %v302 = vpack.c.bf16 %v300, %v300
      %v303 = vpack.c.bf16 %v301, %v301
      %vm304 = vcmask 25600
      %305 = vst.msk [vmem:[#allocation6] sm:$0x3] %vm304, %v302
      %306 = vst.msk [vmem:[#allocation6 + $0x2] sm:$0x3] %vm304, %v303
    $region17: #{tpu_custom_call.1} parent=1 // pred_fallthru
      _
    // Predicated region
    $region18: #{tpu_custom_call.1} parent=1 // pred_check
      _
    $region19: #{tpu_custom_call.1} parent=1 // pred_check_branch
      %308 = sbr.rel (0) target = $region21
    $region20: #{tpu_custom_call.1} parent=1 // pred_region
      %310 = vsyncadd [#allocation5], 0
      %s311 = sshll.u32 [#allocation6], 4
      %s312 = int_to_ptr.vmem [resolvable:$true] %s311
      %s313 = sshll.u32 %s1, 4
      %s314 = int_to_ptr.hbm [resolvable:$true] %s313
      %319 = dma.vmem_to_hbm [thread:$0]  %s312, 64, %s314, [#allocation5], 32, 32, 2
    $region21: #{tpu_custom_call.1} parent=1 // pred_fallthru
      _
    // Predicated region
    $region22: #{tpu_custom_call.1} parent=1 // pred_check
      _
    $region23: #{tpu_custom_call.1} parent=1 // pred_check_branch
      %321 = sbr.rel (0) target = $region25
    $region24: #{tpu_custom_call.1} parent=1 // pred_region
      %323 = dma.done [#allocation5], 64
    $region25: #{tpu_custom_call.1} parent=1 // pred_fallthru
      _
    %324 = vsyncpa [#allocation4], 1
    %325 = vsyncpa [#allocation5], 1

</llo_original>
